<compile_context>
chip_gen: v7x
topology: tpu7x:2x2x1
jax: 0.10.0
libtpu: 0.0.40
codegen_flags: <defaults>
</compile_context>

<pallas_src>
import functools

import jax
import jax.numpy as jnp
from jax.experimental import pallas as pl
from jax.experimental.pallas import tpu as pltpu


def _round_up(x, m):
    return ((x + m - 1) // m) * m


def _vmem_capacity_bytes():
    """Generation-aware VMEM capacity (128 MiB v5e/v6e, 64 MiB per-TC v7x)."""
    try:
        cap = int(pltpu.get_tpu_info().vmem_capacity_bytes)
        if cap > 0:
            return cap
    except Exception:
        pass
    return 64 * 2**20  # conservative fallback (v7x-sized)


def _choose_tn(n_pad):
    """Lane-dense output tile; prefer >=2 j-blocks so v7x's two TCs both get work."""
    tn = 128
    for cand in (512, 256, 128):
        if n_pad % cand == 0:
            tn = cand
            break
    if n_pad // tn < 2 and n_pad >= 256:
        cand = (n_pad // 2) // 128 * 128
        while cand >= 128:
            if n_pad % cand == 0:
                tn = cand
                break
            cand -= 128
    return tn


def _choose_tk(k_pad):
    for cand in (512, 256, 128):
        if k_pad % cand == 0:
            return cand
    return 128  # unreachable: k_pad is a multiple of 128


def _plan_tiles(batch, k_pad, n_pad, x_bytes, w_bytes, b_bytes, o_bytes,
                vmem_budget, force_tk=None):
    """Pick (mode, tm, tn, tk); tm is sized from the VMEM budget so grid_m -> 1
    whenever possible (the weight is re-streamed from HBM grid_m times)."""
    m_full = _round_up(max(batch, 1), 8)
    tn = _choose_tn(n_pad)

    def max_tm(tk, acc_bytes_per_row):
        fixed = 2 * tk * tn * w_bytes + 2 * tn * b_bytes        # dbl-buffered W + bias
        per_row = 2 * tk * x_bytes + 2 * tn * o_bytes + acc_bytes_per_row
        tm = (vmem_budget - fixed) // max(per_row, 1)
        return int((tm // 8) * 8)

    if force_tk is None:
        # 2-D fast path: whole (padded) K in VMEM -> no k grid axis, no
        # accumulator; x is DMA'd once per i-row, weight streamed grid_m times.
        tk = k_pad
        tm = max_tm(tk, 0)
        if tm >= 8:
            return "2d", min(tm, m_full, 4096), tn, tk

    tk = force_tk if force_tk is not None else _choose_tk(k_pad)
    tm = max_tm(tk, tn * 4)                # budget conservatively for an f32 acc row
    tm = max(8, min(tm, m_full, 4096))
    return "3d", tm, tn, tk


# ----------------------------------------------------------------------------- kernels


def _linear_2d_kernel(x_ref, w_ref, b_ref, o_ref, *, compute_dtype):
    # x_ref: [tm, K]  w_ref: [K, tn]  b_ref: [1, tn]  o_ref: [tm, tn]
    x = x_ref[...]
    w = w_ref[...]
    if compute_dtype is not None:
        x = x.astype(compute_dtype)
        w = w.astype(compute_dtype)
    acc = jnp.dot(x, w, preferred_element_type=jnp.float32)
    o_ref[...] = (acc + b_ref[...].astype(jnp.float32)).astype(o_ref.dtype)


def _linear_3d_inplace_kernel(x_ref, w_ref, b_ref, o_ref, *, compute_dtype):
    # f32 output accumulated in place: o block is VMEM-resident across the k axis.
    @pl.when(pl.program_id(2) == 0)
    def _init():
        o_ref[...] = jnp.zeros_like(o_ref)

    x = x_ref[...]
    w = w_ref[...]
    if compute_dtype is not None:
        x = x.astype(compute_dtype)
        w = w.astype(compute_dtype)
    o_ref[...] += jnp.dot(x, w, preferred_element_type=jnp.float32)

    @pl.when(pl.program_id(2) == pl.num_programs(2) - 1)
    def _finalize():
        o_ref[...] += b_ref[...].astype(o_ref.dtype)


def _linear_3d_scratch_kernel(x_ref, w_ref, b_ref, o_ref, acc_ref, *, compute_dtype):
    # Non-f32 output: accumulate in an f32 VMEM scratch, cast once at the end.
    @pl.when(pl.program_id(2) == 0)
    def _init():
        acc_ref[...] = jnp.zeros_like(acc_ref)

    x = x_ref[...]
    w = w_ref[...]
    if compute_dtype is not None:
        x = x.astype(compute_dtype)
        w = w.astype(compute_dtype)
    acc_ref[...] += jnp.dot(x, w, preferred_element_type=jnp.float32)

    @pl.when(pl.program_id(2) == pl.num_programs(2) - 1)
    def _finalize():
        o_ref[...] = (acc_ref[...] + b_ref[...].astype(jnp.float32)).astype(o_ref.dtype)


# ----------------------------------------------------------------------------- forward


@functools.partial(jax.jit,
                   static_argnames=("out_features", "compute_dtype", "force_tk"))
def _classifier_forward_prepared(x, w_kn, bias2, *, out_features,
                                 compute_dtype=None, force_tk=None):
    """y = x @ W.T + b with W already prepared as padded [K, N] (see PallasClassifier)."""
    batch, in_features = x.shape
    k_pad, n_pad = w_kn.shape
    out_dtype = x.dtype

    x_bytes = jnp.dtype(x.dtype).itemsize
    w_bytes = jnp.dtype(w_kn.dtype).itemsize
    b_bytes = jnp.dtype(bias2.dtype).itemsize
    o_bytes = jnp.dtype(out_dtype).itemsize

    vmem_cap = _vmem_capacity_bytes()
    vmem_budget = int(0.70 * vmem_cap)

    if force_tk is not None:
        assert force_tk % 128 == 0 and k_pad % force_tk == 0

    mode, tm, tn, tk = _plan_tiles(batch, k_pad, n_pad, x_bytes, w_bytes,
                                   b_bytes, o_bytes, vmem_budget, force_tk)

    m_pad = _round_up(max(batch, 1), tm)
    if (m_pad, k_pad) != (batch, in_features):
        # Only the (small) activation is padded per call; zero K-padding adds nothing.
        x = jnp.pad(x, ((0, m_pad - batch), (0, k_pad - in_features)))

    grid_m = m_pad // tm
    grid_n = n_pad // tn

    use_scratch = False
    if mode == "2d":
        grid = (grid_m, grid_n)
        in_specs = [
            pl.BlockSpec((tm, tk), lambda i, j: (i, 0)),    # x (DMA'd once per i-row)
            pl.BlockSpec((tk, tn), lambda i, j: (0, j)),    # W in [K, N]
            pl.BlockSpec((1, tn), lambda i, j: (0, j)),     # bias
        ]
        out_specs = pl.BlockSpec((tm, tn), lambda i, j: (i, j))
        scratch_shapes = []
        semantics = ("parallel", "parallel")
        kernel = functools.partial(_linear_2d_kernel, compute_dtype=compute_dtype)
        bytes_accessed = (m_pad * k_pad * x_bytes
                          + grid_m * (k_pad * n_pad * w_bytes + n_pad * b_bytes)
                          + m_pad * n_pad * o_bytes)
    else:
        grid_k = k_pad // tk
        grid = (grid_m, grid_n, grid_k)
        in_specs = [
            pl.BlockSpec((tm, tk), lambda i, j, k: (i, k)),
            pl.BlockSpec((tk, tn), lambda i, j, k: (k, j)),
            pl.BlockSpec((1, tn), lambda i, j, k: (0, j)),
        ]
        out_specs = pl.BlockSpec((tm, tn), lambda i, j, k: (i, j))
        semantics = ("parallel", "parallel", "arbitrary")
        if jnp.dtype(out_dtype) == jnp.dtype(jnp.float32):
            kernel = functools.partial(_linear_3d_inplace_kernel,
                                       compute_dtype=compute_dtype)
            scratch_shapes = []
        else:
            kernel = functools.partial(_linear_3d_scratch_kernel,
                                       compute_dtype=compute_dtype)
            scratch_shapes = [pltpu.VMEM((tm, tn), jnp.float32)]
            use_scratch = True
        bytes_accessed = (grid_n * m_pad * k_pad * x_bytes
                          + grid_m * (k_pad * n_pad * w_bytes + n_pad * b_bytes)
                          + m_pad * n_pad * o_bytes)

    vmem_needed = (2 * tm * tk * x_bytes + 2 * tk * tn * w_bytes
                   + 2 * tn * b_bytes + 2 * tm * tn * o_bytes
                   + (tm * tn * 4 if use_scratch else 0))
    vmem_limit = int(min(0.9 * vmem_cap, max(32 * 2**20, 1.25 * vmem_needed)))

    cost = pl.CostEstimate(flops=2 * m_pad * n_pad * k_pad, transcendentals=0,
                           bytes_accessed=int(bytes_accessed))

    out = pl.pallas_call(
        kernel,
        out_shape=jax.ShapeDtypeStruct((m_pad, n_pad), out_dtype),
        grid_spec=pltpu.PrefetchScalarGridSpec(
            num_scalar_prefetch=0,
            grid=grid,
            in_specs=in_specs,
            out_specs=out_specs,
            scratch_shapes=scratch_shapes,
        ),
        compiler_params=pltpu.CompilerParams(
            dimension_semantics=semantics,
            vmem_limit_bytes=vmem_limit,
        ),
        cost_estimate=cost,
    )(x, w_kn, bias2)

    if (m_pad, n_pad) != (batch, out_features):
        out = out[:batch, :out_features]
    return out


class PallasClassifier:
    """Pallas-TPU equivalent of the PyTorch `Classifier` (one nn.Linear layer).

    Parameter preparation (pad N/K to 128-multiples, transpose to [K, N], optional
    bf16 cast) happens ONCE here — not on every forward call.
    """

    def __init__(self, weight, bias, *, param_dtype=None, compute_dtype=None):
        out_f, in_f = weight.shape
        assert bias.shape == (out_f,)
        n_pad = _round_up(out_f, 128)
        k_pad = _round_up(in_f, 128)
        w = weight if param_dtype is None else weight.astype(param_dtype)
        w = jnp.pad(w, ((0, n_pad - out_f), (0, k_pad - in_f)))
        self.w_kn = jnp.transpose(w)                      # one-time [K, N] HBM relayout
        self.bias2 = jnp.pad(bias, (0, n_pad - out_f)).reshape(1, n_pad)
        self.out_features = out_f
        self.in_features = in_f
        self.compute_dtype = compute_dtype

    def __call__(self, x, *, force_tk=None):
        assert x.ndim == 2 and x.shape[1] == self.in_features
        return _classifier_forward_prepared(
            x, self.w_kn, self.bias2,
            out_features=self.out_features,
            compute_dtype=self.compute_dtype,
            force_tk=force_tk)


if __name__ == "__main__":
    key = jax.random.PRNGKey(0)

    def make_case(k, batch, in_f, out_f, dtype=jnp.float32):
        kx, kw, kb = jax.random.split(k, 3)
        xx = jax.random.normal(kx, (batch, in_f), dtype=jnp.float32).astype(dtype)
        ww = jax.random.normal(kw, (out_f, in_f), dtype=jnp.float32) * 0.1
        bb = jax.random.normal(kb, (out_f,), dtype=jnp.float32) * 0.1
        return xx, ww, bb

    k1, k2, k3, k4 = jax.random.split(key, 4)

    # Case 1: the module's demo shape (layer_unit_count_list = [32, 8]), batch=2.
    x, w, b = make_case(k1, batch=2, in_f=32, out_f=8)
    clf = PallasClassifier(w, b)
    out = jax.block_until_ready(clf(x))
    ref = x @ w.T + b
    assert out.shape == (2, 8)
    assert jnp.allclose(out, ref, atol=1e-3, rtol=1e-3)

    # Case 2: non-tile-aligned shapes (padding path, grid_n = 2).
    x2, w2, b2 = make_case(k2, batch=10, in_f=96, out_f=200)
    clf2 = PallasClassifier(w2, b2)
    out2 = jax.block_until_ready(clf2(x2))
    ref2 = x2 @ w2.T + b2
    assert out2.shape == (10, 200)
    assert jnp.allclose(out2, ref2, atol=1e-3, rtol=1e-3)

    # Case 3: force the 3-D (k-split) fallback, f32 output accumulated in place.
    x3, w3, b3 = make_case(k3, batch=12, in_f=384, out_f=256)
    clf3 = PallasClassifier(w3, b3)
    out3 = jax.block_until_ready(clf3(x3, force_tk=128))
    ref3 = x3 @ w3.T + b3
    assert out3.shape == (12, 256)
    assert jnp.allclose(out3, ref3, atol=2e-2, rtol=2e-2)

    # Case 4: bf16 weights stored in HBM + bf16 MXU compute (f32 accumulate/output).
    clf4 = PallasClassifier(w2, b2, param_dtype=jnp.bfloat16,
                            compute_dtype=jnp.bfloat16)
    out4 = jax.block_until_ready(clf4(x2))
    ref4 = jnp.dot(x2.astype(jnp.bfloat16), w2.T.astype(jnp.bfloat16),
                   preferred_element_type=jnp.float32) + b2
    assert jnp.allclose(out4, ref4, atol=2e-2, rtol=2e-2)

    # Case 5: bf16 activations + bf16 output on the 3-D fallback (f32 scratch acc).
    x5, w5, b5 = make_case(k4, batch=16, in_f=256, out_f=384, dtype=jnp.bfloat16)
    clf5 = PallasClassifier(w5, b5, param_dtype=jnp.bfloat16,
                            compute_dtype=jnp.bfloat16)
    out5 = jax.block_until_ready(clf5(x5, force_tk=128))
    ref5 = (jnp.dot(x5, w5.astype(jnp.bfloat16).T,
                    preferred_element_type=jnp.float32) + b5).astype(jnp.bfloat16)
    assert out5.shape == (16, 384)
    assert jnp.allclose(out5.astype(jnp.float32), ref5.astype(jnp.float32),
                        atol=5e-2, rtol=5e-2)

    print("KERNEL_OK")
</pallas_src>

<mosaic_0001>
module attributes {stable_mosaic.version = 11 : i64} {
  func.func @_linear_2d_kernel(%arg0: i32, %arg1: i32, %arg2: memref<8x128xf32, #tpu.memory_space<vmem>>, %arg3: memref<128x128xf32, #tpu.memory_space<vmem>>, %arg4: memref<1x128xf32, #tpu.memory_space<vmem>>, %arg5: memref<8x128xf32, #tpu.memory_space<vmem>>) attributes {dimension_semantics = [#tpu.dimension_semantics<parallel>, #tpu.dimension_semantics<parallel>], iteration_bounds = array<i64: 1, 1>, scalar_prefetch = 0 : i64, scratch_operands = 0 : i64, tpu.core_type = #tpu.core_type<tc>, window_params = [{transform_indices = @transform_0, window_bounds = array<i64: 8, 128>}, {transform_indices = @transform_1, window_bounds = array<i64: 128, 128>}, {transform_indices = @transform_2, window_bounds = array<i64: 1, 128>}, {transform_indices = @transform_3, window_bounds = array<i64: 8, 128>}]} {
    %c0 = arith.constant 0 : index
    %c0_0 = arith.constant 0 : index
    %0 = vector.load %arg2[%c0, %c0_0] : memref<8x128xf32, #tpu.memory_space<vmem>>, vector<8x128xf32>
    %c0_1 = arith.constant 0 : index
    %c0_2 = arith.constant 0 : index
    %1 = vector.load %arg3[%c0_1, %c0_2] : memref<128x128xf32, #tpu.memory_space<vmem>>, vector<128x128xf32>
    %cst = arith.constant dense<0.000000e+00> : vector<8x128xf32>
    %2 = tpu.matmul %0, %1, %cst {dimension_numbers = #tpu.dot_dimension_numbers<[1], [0], [0], [1], [0, 0, 1, 1], [], []>} : vector<8x128xf32>, vector<128x128xf32>, vector<8x128xf32> -> vector<8x128xf32>
    %c0_3 = arith.constant 0 : index
    %c0_4 = arith.constant 0 : index
    %3 = vector.load %arg4[%c0_3, %c0_4] : memref<1x128xf32, #tpu.memory_space<vmem>>, vector<1x128xf32>
    %4 = vector.broadcast %3 : vector<1x128xf32> to vector<8x128xf32>
    %5 = arith.addf %2, %4 : vector<8x128xf32>
    %c0_5 = arith.constant 0 : index
    %c0_6 = arith.constant 0 : index
    %6 = vector.load %arg5[%c0_5, %c0_6] : memref<8x128xf32, #tpu.memory_space<vmem>>, vector<8x128xf32>
    tpu.vector_store %arg5[%c0_5, %c0_6], %5 {strides = array<i32>} : memref<8x128xf32, #tpu.memory_space<vmem>>, vector<8x128xf32>,
    return
  }
  func.func @transform_0(%arg0: i32, %arg1: i32) -> (i32, i32) {
    %c0_i32 = arith.constant 0 : i32
    %c0_i32_0 = arith.constant 0 : i32
    return %arg0, %c0_i32 : i32, i32
  }
  func.func @transform_1(%arg0: i32, %arg1: i32) -> (i32, i32) {
    %c0_i32 = arith.constant 0 : i32
    %c0_i32_0 = arith.constant 0 : i32
    return %c0_i32, %arg1 : i32, i32
  }
  func.func @transform_2(%arg0: i32, %arg1: i32) -> (i32, i32) {
    %c0_i32 = arith.constant 0 : i32
    %c0_i32_0 = arith.constant 0 : i32
    return %c0_i32, %arg1 : i32, i32
  }
  func.func @transform_3(%arg0: i32, %arg1: i32) -> (i32, i32) {
    %c0_i32 = arith.constant 0 : i32
    return %arg0, %arg1 : i32, i32
  }
}

</mosaic_0001>

<llo_original>
// kernel: _classifier_forward_prepared.1
$region0: #{_classifier_forward_prepared.1}
  #allocation0 [shape = 'u32[]', space=smem, size = 0x4, offset = 0x4, fixed_abs, tag = 'smem constant byte address 0x4 - core index']
  #allocation1 [shape = 'u32[144,128]{1,0:T(1,128)}', space=vmem, size = 0x12000, scoped, tag = 'internal scratch']
  %s0 = inlined_call_operand.vmem [shape: f32[8,128], index: 0, kind: input, shape index: {}]
  %s1 = inlined_call_operand.hbm [shape: f32[128,128], index: 1, kind: input, shape index: {}]
  %s2 = inlined_call_operand.vmem [shape: f32[1,128], index: 2, kind: input, shape index: {}]
  %s3 = inlined_call_operand.vmem [shape: f32[8,128], index: 3, kind: output, shape index: {}]
  %s4 = sld [smem:[#allocation0]]
  $region26: #{_classifier_forward_prepared.1} parent=0
    _
  %s6 = ssub.s32 1, %s4
  %s7 = scalar_select 0, %s6, %s4
  $region1: #{_classifier_forward_prepared.1} parent=0
    #allocation2 [shape = 'u8[65536]{0}', space=vmem, size = 0x10000, scoped, tag = 'input window, operand 1, single buffered']
    #allocation3 [shape = 's32[1]{0}', space=sflag, size = 0x4, scoped, tag = 'scoped memory for _classifier_forward_prepared.1']
    %8 = vsyncpa [#allocation3], 0
    // Predicated region
    $region2: #{_classifier_forward_prepared.1} parent=1 // pred_check
      _
    $region3: #{_classifier_forward_prepared.1} parent=1 // pred_check_branch
      %10 = sbr.rel (0) target = $region5
    $region4: #{_classifier_forward_prepared.1} parent=1 // pred_region
      _
    $region5: #{_classifier_forward_prepared.1} parent=1 // pred_fallthru
      _
    // Predicated region
    $region6: #{_classifier_forward_prepared.1} parent=1 // pred_check
      _
    $region7: #{_classifier_forward_prepared.1} parent=1 // pred_check_branch
      %12 = sbr.rel (0) target = $region9
    $region8: #{_classifier_forward_prepared.1} parent=1 // pred_region
      %s14 = ssub.s32 2048, 2048
      %15 = vsyncadd [#allocation3], %s14
      %s16 = sshll.u32 [#allocation2], 4
      %s17 = int_to_ptr.vmem [resolvable:$true] %s16
      %22 = dma.hbm_to_vmem [thread:$0]  %s1, 2048, %s17, [#allocation3], 128, 128, 8
    $region9: #{_classifier_forward_prepared.1} parent=1 // pred_fallthru
      _
    // Predicated region
    $region10: #{_classifier_forward_prepared.1} parent=1 // pred_check
      _
    $region11: #{_classifier_forward_prepared.1} parent=1 // pred_check_branch
      %24 = sbr.rel (0) target = $region13
    $region12: #{_classifier_forward_prepared.1} parent=1 // pred_region
      _
    $region13: #{_classifier_forward_prepared.1} parent=1 // pred_fallthru
      _
    // Predicated region
    $region14: #{_classifier_forward_prepared.1} parent=1 // pred_check
      _
    $region15: #{_classifier_forward_prepared.1} parent=1 // pred_check_branch
      %26 = sbr.rel (0) target = $region17
    $region16: #{_classifier_forward_prepared.1} parent=1 // pred_region
      %27 = dma.done [#allocation3], 2048
    $region17: #{_classifier_forward_prepared.1} parent=1 // pred_fallthru
      _
    %v28 = vld [vmem:[%s0] sm:$0xff]
    %v29 = vld [vmem:[#allocation2] sm:$0xff]
    %v30 = vld [vmem:[#allocation2 + $0x8] sm:$0xff]
    %v31 = vld [vmem:[#allocation2 + $0x10] sm:$0xff]
    %v32 = vld [vmem:[#allocation2 + $0x18] sm:$0xff]
    %v33 = vld [vmem:[#allocation2 + $0x20] sm:$0xff]
    %v34 = vld [vmem:[#allocation2 + $0x28] sm:$0xff]
    %v35 = vld [vmem:[#allocation2 + $0x30] sm:$0xff]
    %v36 = vld [vmem:[#allocation2 + $0x38] sm:$0xff]
    %v37 = vld [vmem:[#allocation2 + $0x40] sm:$0xff]
    %v38 = vld [vmem:[#allocation2 + $0x48] sm:$0xff]
    %v39 = vld [vmem:[#allocation2 + $0x50] sm:$0xff]
    %v40 = vld [vmem:[#allocation2 + $0x58] sm:$0xff]
    %v41 = vld [vmem:[#allocation2 + $0x60] sm:$0xff]
    %v42 = vld [vmem:[#allocation2 + $0x68] sm:$0xff]
    %v43 = vld [vmem:[#allocation2 + $0x70] sm:$0xff]
    %v44 = vld [vmem:[#allocation2 + $0x78] sm:$0xff]
    %v45 = vld [vmem:[%s2] sm:$0x1]
    %v47 = vlaneseq
    %v48 = vshrl.u32 %v47, 7
    %v49 = vsub.s32 0, %v48
    %v50 = vrot.slane %v45, %v49
    %52 = vmatprep.subr.mxu0 0.0
    %53 = vmatpush1.msra.mxu0 %v29
    %54 = vmatprep.subr.mxu0 0.0
    %55 = vmatpush1.msra.mxu0 %v30
    %56 = vmatprep.subr.mxu0 0.0
    %57 = vmatpush1.msra.mxu0 %v31
    %58 = vmatprep.subr.mxu0 0.0
    %59 = vmatpush1.msra.mxu0 %v32
    %60 = vmatprep.subr.mxu0 0.0
    %61 = vmatpush1.msra.mxu0 %v33
    %62 = vmatprep.subr.mxu0 0.0
    %63 = vmatpush1.msra.mxu0 %v34
    %64 = vmatprep.subr.mxu0 0.0
    %65 = vmatpush1.msra.mxu0 %v35
    %66 = vmatprep.subr.mxu0 0.0
    %67 = vmatpush1.msra.mxu0 %v36
    %68 = vmatprep.subr.mxu0 0.0
    %69 = vmatpush1.msra.mxu0 %v37
    %70 = vmatprep.subr.mxu0 0.0
    %71 = vmatpush1.msra.mxu0 %v38
    %72 = vmatprep.subr.mxu0 0.0
    %73 = vmatpush1.msra.mxu0 %v39
    %74 = vmatprep.subr.mxu0 0.0
    %75 = vmatpush1.msra.mxu0 %v40
    %76 = vmatprep.subr.mxu0 0.0
    %77 = vmatpush1.msra.mxu0 %v41
    %78 = vmatprep.subr.mxu0 0.0
    %79 = vmatpush1.msra.mxu0 %v42
    %80 = vmatprep.subr.mxu0 0.0
    %81 = vmatpush1.msra.mxu0 %v43
    %82 = vmatprep.subr.mxu0 0.0
    %83 = vmatpush1.msra.mxu0 %v44
    %84 = vmatprep.subr.mxu0 0.0
    %85 = vmatpush1.msra.mxu0 0.0
    %86 = vmatprep.subr.mxu0 0.0
    %87 = vmatpush1.msra.mxu0 0.0
    %88 = vmatprep.subr.mxu0 0.0
    %89 = vmatpush1.msra.mxu0 0.0
    %90 = vmatprep.subr.mxu0 0.0
    %91 = vmatpush1.msra.mxu0 0.0
    %92 = vmatprep.subr.mxu0 0.0
    %93 = vmatpush1.msra.mxu0 0.0
    %94 = vmatprep.subr.mxu0 0.0
    %95 = vmatpush1.msra.mxu0 0.0
    %96 = vmatprep.subr.mxu0 0.0
    %97 = vmatpush1.msra.mxu0 0.0
    %98 = vmatprep.subr.mxu0 0.0
    %99 = vmatpush1.msra.mxu0 0.0
    %100 = vmatprep.subr.mxu0 0.0
    %101 = vmatpush1.msra.mxu0 0.0
    %102 = vmatprep.subr.mxu0 0.0
    %103 = vmatpush1.msra.mxu0 0.0
    %104 = vmatprep.subr.mxu0 0.0
    %105 = vmatpush1.msra.mxu0 0.0
    %106 = vmatprep.subr.mxu0 0.0
    %107 = vmatpush1.msra.mxu0 0.0
    %108 = vmatprep.subr.mxu0 0.0
    %109 = vmatpush1.msra.mxu0 0.0
    %110 = vmatprep.subr.mxu0 0.0
    %111 = vmatpush1.msra.mxu0 0.0
    %112 = vmatprep.subr.mxu0 0.0
    %113 = vmatpush1.msra.mxu0 0.0
    %114 = vmatprep.subr.mxu0 0.0
    %115 = vmatpush1.msra.mxu0 0.0
    %116 = vmatprep.mubr.f32.mxu0 0.0
    %117 = vmatmul.mubr.f32.gmra.mrb[0].mxu0 %v28
    %v118 = vpop.f32.mrb[0].mxu0
    %v119 = vadd.f32 %v50, %v118
    %v120 = vpop.f32.mrb[0].mxu0
    %121 = vdwg.mxu0
    %122 = vst [vmem:[%s3] sm:$0xff] %v119
    // Predicated region
    $region18: #{_classifier_forward_prepared.1} parent=1 // pred_check
      _
    $region19: #{_classifier_forward_prepared.1} parent=1 // pred_check_branch
      %124 = sbr.rel (0) target = $region21
    $region20: #{_classifier_forward_prepared.1} parent=1 // pred_region
      _
    $region21: #{_classifier_forward_prepared.1} parent=1 // pred_fallthru
      _
    // Predicated region
    $region22: #{_classifier_forward_prepared.1} parent=1 // pred_check
      _
    $region23: #{_classifier_forward_prepared.1} parent=1 // pred_check_branch
      %126 = sbr.rel (0) target = $region25
    $region24: #{_classifier_forward_prepared.1} parent=1 // pred_region
      _
    $region25: #{_classifier_forward_prepared.1} parent=1 // pred_fallthru
      _
    %127 = vsyncpa [#allocation3], 1

</llo_original>
